<compile_context>
chip_gen: v6e
topology: v6e:2x2x1
jax: 0.10.0
libtpu: 0.0.40
codegen_flags: <defaults>
</compile_context>

<pallas_src>
import math
import functools

import jax
import jax.numpy as jnp
from jax.experimental import pallas as pl
from jax.experimental.pallas import tpu as pltpu


def _layernorm_kernel(emb_ref, gamma_ref, beta_ref, out_ref, *, eps, inv_h):
    # emb_ref:   (TP, H) tile of the relative embedding table
    # gamma_ref: (1, H)  LayerNorm weight (constant index_map -> VMEM-resident)
    # beta_ref:  (1, H)  LayerNorm bias
    x = emb_ref[...].astype(jnp.float32)

    # Two-pass variance (torch-equivalent numerics); tile is VMEM-resident so the
    # second reduce is essentially free (XLU slot, not the store/HBM bottleneck).
    mean = jnp.sum(x, axis=-1, keepdims=True) * inv_h
    xc = x - mean
    var = jnp.sum(xc * xc, axis=-1, keepdims=True) * inv_h
    inv = jax.lax.rsqrt(var + eps)

    y = xc * inv
    y = y * gamma_ref[...].astype(jnp.float32) + beta_ref[...].astype(jnp.float32)
    out_ref[...] = y.astype(out_ref.dtype)


def relative_positional_embeddings_xla(relative_embedding, ln_weight, ln_bias,
                                       *, eps=1e-7, out_dtype=None):
    """Plain-jnp reference (and the preferred path when H < 128 / not lane-dense:
    let XLA fuse the LayerNorm into the consumer's gather/einsum instead of
    paying a standalone kernel launch)."""
    if out_dtype is None:
        out_dtype = relative_embedding.dtype
    x = relative_embedding.astype(jnp.float32)
    mean = jnp.mean(x, axis=-1, keepdims=True)
    var = jnp.mean((x - mean) ** 2, axis=-1, keepdims=True)
    y = (x - mean) * jax.lax.rsqrt(var + eps)
    y = y * ln_weight.astype(jnp.float32) + ln_bias.astype(jnp.float32)
    return y.astype(out_dtype)


def relative_positional_embeddings_fwd(relative_embedding, ln_weight, ln_bias,
                                       *, eps=1e-7, out_dtype=None):
    """Pallas equivalent of RelativePositionalEmbeddings.forward().

    relative_embedding: (2*B-1, H)
    ln_weight, ln_bias: (H,)
    returns: (2*B-1, H) layer-normalized embedding table (dtype = out_dtype or input dtype).

    NOTE: forward() ignores its input x, so compute this once per parameter
    update and cache / fuse it — do not re-launch per model forward pass.
    """
    P, H = relative_embedding.shape
    if out_dtype is None:
        out_dtype = relative_embedding.dtype

    in_b = jnp.dtype(relative_embedding.dtype).itemsize
    out_b = jnp.dtype(out_dtype).itemsize

    # Conservative working-set budget: fits v5e's 16 MiB default scoped VMEM with
    # headroom for Mosaic internal scratch; also well under v6e/v7x's 32 MiB
    # default scoped limit (v7x physical VMEM is only 64 MiB total).
    budget = 8 * 1024 * 1024
    # ~12 B/elem of live f32 intermediates (x, xc, y) on top of the in/out tiles.
    single_step_bytes = P * H * (in_b + out_b + 12)

    if single_step_bytes <= budget:
        # Typical case (table is at most a few MB): one grid step, block == full
        # array (no (8,128) divisibility requirement, no padding, no slicing).
        tp = P
    else:
        # Large-table fallback: row-tile with double-buffered in/out.
        per_row = H * (2 * in_b + 2 * out_b + 12)
        tp = max(8, (budget // per_row) // 8 * 8)
    grid = (pl.cdiv(P, tp),)
    # Fallback note: if tp does not divide P, the trailing partial block reads
    # undefined rows and its out-of-bounds writes are dropped; LayerNorm is
    # strictly per-row so valid rows are unaffected.

    gamma = ln_weight.reshape(1, H)
    beta = ln_bias.reshape(1, H)

    kernel = functools.partial(_layernorm_kernel, eps=eps, inv_h=1.0 / H)
    return pl.pallas_call(
        kernel,
        out_shape=jax.ShapeDtypeStruct((P, H), out_dtype),
        grid=grid,
        in_specs=[
            pl.BlockSpec((tp, H), lambda i: (i, 0)),   # row-tiled table (tp==P typically)
            pl.BlockSpec((1, H), lambda i: (0, 0)),    # gamma: constant -> resident
            pl.BlockSpec((1, H), lambda i: (0, 0)),    # beta : constant -> resident
        ],
        out_specs=pl.BlockSpec((tp, H), lambda i: (i, 0)),
        compiler_params=pltpu.CompilerParams(
            # "parallel" vs "arbitrary" has ~zero measured impact; this op is
            # HBM/launch-overhead bound, so no 2-TC restructuring on v7x either.
            dimension_semantics=("arbitrary",),
        ),
    )(relative_embedding, gamma, beta)


def init_params(key, hidden_size: int, position_bucket_size: int = 8):
    """Deterministic re-implementation of the module's __init__/initialize."""
    num_pos = 2 * position_bucket_size - 1
    std = math.sqrt(2.0 / (hidden_size + num_pos))
    # trunc_normal_(mean=0, std=std, a=-2*std, b=2*std)
    emb = jax.random.truncated_normal(
        key, -2.0, 2.0, (num_pos, hidden_size), dtype=jnp.float32) * std
    ln_weight = jnp.ones((hidden_size,), jnp.float32)
    ln_bias = jnp.zeros((hidden_size,), jnp.float32)
    return emb, ln_weight, ln_bias


if __name__ == "__main__":
    key = jax.random.PRNGKey(0)

    # ---- Module-sized config (hidden=32, bucket=8 -> table (15, 32)) ----------
    # H=32 is not lane-dense (see notes); kept as the spec-matching demo and
    # checked tightly against the torch-semantics reference.
    hidden_size, position_bucket_size = 32, 8
    emb, ln_w, ln_b = init_params(key, hidden_size, position_bucket_size)

    fwd = jax.jit(relative_positional_embeddings_fwd)   # computed ONCE and cached
    out = jax.block_until_ready(fwd(emb, ln_w, ln_b))

    ref = relative_positional_embeddings_xla(emb, ln_w, ln_b)
    assert out.shape == (2 * position_bucket_size - 1, hidden_size)
    assert out.dtype == emb.dtype
    assert jnp.allclose(out, ref, atol=1e-5, rtol=1e-5)

    # ---- Lane-dense production-like config with bf16 writeback ----------------
    # (H multiple of 128 -> unmasked full-lane stores; bf16 out halves HBM
    #  writeback bytes, which is the tightest resource on v5e.)
    key2 = jax.random.PRNGKey(0)
    emb2, ln_w2, ln_b2 = init_params(key2, 256, 64)       # table (127, 256)
    fwd_bf16 = jax.jit(lambda e, w, b: relative_positional_embeddings_fwd(
        e, w, b, out_dtype=jnp.bfloat16))
    out2 = jax.block_until_ready(fwd_bf16(emb2, ln_w2, ln_b2))

    ref2 = relative_positional_embeddings_xla(emb2, ln_w2, ln_b2)
    assert out2.shape == (127, 256) and out2.dtype == jnp.bfloat16
    assert jnp.allclose(out2.astype(jnp.float32), ref2, atol=3e-2, rtol=3e-2)

    print("KERNEL_OK")
</pallas_src>

<mosaic_0001>
module attributes {stable_mosaic.version = 11 : i64} {
  func.func @_layernorm_kernel(%arg0: i32, %arg1: memref<15x32xf32, #tpu.memory_space<vmem>>, %arg2: memref<1x32xf32, #tpu.memory_space<vmem>>, %arg3: memref<1x32xf32, #tpu.memory_space<vmem>>, %arg4: memref<15x32xf32, #tpu.memory_space<vmem>>) attributes {dimension_semantics = [#tpu.dimension_semantics<arbitrary>], iteration_bounds = array<i64: 1>, scalar_prefetch = 0 : i64, scratch_operands = 0 : i64, tpu.core_type = #tpu.core_type<tc>, window_params = [{transform_indices = @transform_0, window_bounds = array<i64: 15, 32>}, {pipeline_mode = #tpu.pipeline_mode<synchronous>, transform_indices = @transform_1, window_bounds = array<i64: 1, 32>}, {pipeline_mode = #tpu.pipeline_mode<synchronous>, transform_indices = @transform_2, window_bounds = array<i64: 1, 32>}, {transform_indices = @transform_3, window_bounds = array<i64: 15, 32>}]} {
    %c0 = arith.constant 0 : index
    %c0_0 = arith.constant 0 : index
    %0 = vector.load %arg1[%c0, %c0_0] : memref<15x32xf32, #tpu.memory_space<vmem>>, vector<15x32xf32>
    %cst = arith.constant dense<0.000000e+00> : vector<15xf32>
    %1 = vector.multi_reduction <add>, %0, %cst [1] : vector<15x32xf32> to vector<15xf32>
    %2 = vector.shape_cast %1 : vector<15xf32> to vector<15x1xf32>
    %cst_1 = arith.constant 3.125000e-02 : f32
    %3 = vector.broadcast %cst_1 : f32 to vector<15x1xf32>
    %4 = arith.mulf %2, %3 : vector<15x1xf32>
    %5 = vector.broadcast %4 : vector<15x1xf32> to vector<15x32xf32>
    %6 = arith.subf %0, %5 : vector<15x32xf32>
    %7 = arith.mulf %6, %6 : vector<15x32xf32>
    %cst_2 = arith.constant dense<0.000000e+00> : vector<15xf32>
    %8 = vector.multi_reduction <add>, %7, %cst_2 [1] : vector<15x32xf32> to vector<15xf32>
    %9 = vector.shape_cast %8 : vector<15xf32> to vector<15x1xf32>
    %cst_3 = arith.constant 3.125000e-02 : f32
    %10 = vector.broadcast %cst_3 : f32 to vector<15x1xf32>
    %11 = arith.mulf %9, %10 : vector<15x1xf32>
    %cst_4 = arith.constant 1.000000e-07 : f32
    %12 = vector.broadcast %cst_4 : f32 to vector<15x1xf32>
    %13 = arith.addf %11, %12 : vector<15x1xf32>
    %14 = math.rsqrt %13 : vector<15x1xf32>
    %15 = vector.broadcast %14 : vector<15x1xf32> to vector<15x32xf32>
    %16 = arith.mulf %6, %15 : vector<15x32xf32>
    %c0_5 = arith.constant 0 : index
    %c0_6 = arith.constant 0 : index
    %17 = vector.load %arg2[%c0_5, %c0_6] : memref<1x32xf32, #tpu.memory_space<vmem>>, vector<1x32xf32>
    %18 = vector.broadcast %17 : vector<1x32xf32> to vector<15x32xf32>
    %19 = arith.mulf %16, %18 : vector<15x32xf32>
    %c0_7 = arith.constant 0 : index
    %c0_8 = arith.constant 0 : index
    %20 = vector.load %arg3[%c0_7, %c0_8] : memref<1x32xf32, #tpu.memory_space<vmem>>, vector<1x32xf32>
    %21 = vector.broadcast %20 : vector<1x32xf32> to vector<15x32xf32>
    %22 = arith.addf %19, %21 : vector<15x32xf32>
    %c0_9 = arith.constant 0 : index
    %c0_10 = arith.constant 0 : index
    %23 = vector.load %arg4[%c0_9, %c0_10] : memref<15x32xf32, #tpu.memory_space<vmem>>, vector<15x32xf32>
    tpu.vector_store %arg4[%c0_9, %c0_10], %22 {strides = array<i32>} : memref<15x32xf32, #tpu.memory_space<vmem>>, vector<15x32xf32>,
    return
  }
  func.func @transform_0(%arg0: i32) -> (i32, i32) {
    %c0_i32 = arith.constant 0 : i32
    %c0_i32_0 = arith.constant 0 : i32
    return %arg0, %c0_i32 : i32, i32
  }
  func.func @transform_1(%arg0: i32) -> (i32, i32) {
    %c0_i32 = arith.constant 0 : i32
    %c0_i32_0 = arith.constant 0 : i32
    %c0_i32_1 = arith.constant 0 : i32
    return %c0_i32, %c0_i32_0 : i32, i32
  }
  func.func @transform_2(%arg0: i32) -> (i32, i32) {
    %c0_i32 = arith.constant 0 : i32
    %c0_i32_0 = arith.constant 0 : i32
    %c0_i32_1 = arith.constant 0 : i32
    return %c0_i32, %c0_i32_0 : i32, i32
  }
  func.func @transform_3(%arg0: i32) -> (i32, i32) {
    %c0_i32 = arith.constant 0 : i32
    %c0_i32_0 = arith.constant 0 : i32
    return %arg0, %c0_i32 : i32, i32
  }
}

</mosaic_0001>

<llo_original>
// kernel: relative_positional_embeddings_fwd.1
$region0: #{relative_positional_embeddings_fwd.1}
  #allocation0 [shape = 'u32[]', space=smem, size = 0x4, offset = 0x4, fixed_abs, tag = 'smem constant byte address 0x4 - core index']
  #allocation1 [shape = 'u32[144,128]{1,0:T(1,128)}', space=vmem, size = 0x12000, scoped, tag = 'internal scratch']
  %s0 = inlined_call_operand.hbm [shape: f32[15,32], index: 0, kind: input, shape index: {}]
  %s1 = inlined_call_operand.vmem [shape: f32[1,32], index: 1, kind: input, shape index: {}]
  %s2 = inlined_call_operand.vmem [shape: f32[1,32], index: 2, kind: input, shape index: {}]
  %s3 = inlined_call_operand.hbm [shape: f32[15,32], index: 3, kind: output, shape index: {}]
  %s4 = sld [smem:[#allocation0]]
  $region26: #{relative_positional_embeddings_fwd.1} parent=0
    _
  %s6 = ssub.s32 1, %s4
  %s7 = scalar_select 0, %s6, %s4
  $region1: #{relative_positional_embeddings_fwd.1} parent=0
    #allocation2 [shape = 'u8[8192]{0}', space=vmem, size = 0x2000, scoped, tag = 'input window, operand 0, single buffered']
    #allocation3 [shape = 's32[1]{0}', space=sflag, size = 0x4, scoped, tag = 'scoped memory for relative_positional_embeddings_fwd.1']
    #allocation4 [shape = 's32[1]{0}', space=sflag, size = 0x4, scoped, tag = 'scoped memory for relative_positional_embeddings_fwd.1']
    #allocation5 [shape = 'u8[8192]{0}', space=vmem, size = 0x2000, scoped, tag = 'output window, operand 0, single buffered']
    %8 = vsyncpa [#allocation3], 0
    %9 = vsyncpa [#allocation4], 0
    // Predicated region
    $region2: #{relative_positional_embeddings_fwd.1} parent=1 // pred_check
      _
    $region3: #{relative_positional_embeddings_fwd.1} parent=1 // pred_check_branch
      %11 = sbr.rel (0) target = $region5
    $region4: #{relative_positional_embeddings_fwd.1} parent=1 // pred_region
      %s13 = ssub.s32 256, 256
      %14 = vsyncadd [#allocation3], %s13
      %s15 = sshll.u32 [#allocation2], 4
      %s16 = int_to_ptr.vmem [resolvable:$true] %s15
      %21 = dma.hbm_to_vmem [thread:$0]  %s0, 256, %s16, [#allocation3], 128, 128, 8
    $region5: #{relative_positional_embeddings_fwd.1} parent=1 // pred_fallthru
      _
    // Predicated region
    $region6: #{relative_positional_embeddings_fwd.1} parent=1 // pred_check
      _
    $region7: #{relative_positional_embeddings_fwd.1} parent=1 // pred_check_branch
      %23 = sbr.rel (0) target = $region9
    $region8: #{relative_positional_embeddings_fwd.1} parent=1 // pred_region
      _
    $region9: #{relative_positional_embeddings_fwd.1} parent=1 // pred_fallthru
      _
    // Predicated region
    $region10: #{relative_positional_embeddings_fwd.1} parent=1 // pred_check
      _
    $region11: #{relative_positional_embeddings_fwd.1} parent=1 // pred_check_branch
      %25 = sbr.rel (0) target = $region13
    $region12: #{relative_positional_embeddings_fwd.1} parent=1 // pred_region
      _
    $region13: #{relative_positional_embeddings_fwd.1} parent=1 // pred_fallthru
      _
    // Predicated region
    $region14: #{relative_positional_embeddings_fwd.1} parent=1 // pred_check
      _
    $region15: #{relative_positional_embeddings_fwd.1} parent=1 // pred_check_branch
      %27 = sbr.rel (0) target = $region17
    $region16: #{relative_positional_embeddings_fwd.1} parent=1 // pred_region
      %28 = dma.done [#allocation3], 256
    $region17: #{relative_positional_embeddings_fwd.1} parent=1 // pred_fallthru
      _
    %v29 = vld [vmem:[#allocation2] sm:$0xff]
    %v30 = vld [vmem:[#allocation2 + $0x8] sm:$0x7f]
    %vm31 = vcmask 261120
    %v32 = vsel %vm31, %v29, 0.0
    %33 = vadd.xlane.f32.xlu0 %v32
    %v34 = vpop.xlane.xlu0 %33
    %vm35 = vcmask 260096
    %v36 = vsel %vm35, %v30, 0.0
    %37 = vadd.xlane.f32.xlu0 %v36
    %v38 = vpop.xlane.xlu0 %37
    %v39 = vmul.f32 %v34, 0.03125
    %v40 = vmul.f32 %v38, 0.03125
    %v41 = vsub.f32 %v29, %v39
    %v42 = vsub.f32 %v30, %v40
    %v43 = vmul.f32 %v41, %v41
    %v44 = vmul.f32 %v42, %v42
    %v45 = vsel %vm31, %v43, 0.0
    %46 = vadd.xlane.f32.xlu0 %v45
    %v47 = vpop.xlane.xlu0 %46
    %v48 = vsel %vm35, %v44, 0.0
    %49 = vadd.xlane.f32.xlu0 %v48
    %v50 = vpop.xlane.xlu0 %49
    %v51 = vmul.f32 %v47, 0.03125
    %v52 = vmul.f32 %v50, 0.03125
    %v53 = vadd.f32 %v51, 1e-07
    %v54 = vadd.f32 %v52, 1e-07
    %v55 = vrsqrt.pop %v53
    %v56 = vrsqrt.pop %v54
    %v57 = vmul.f32 %v41, %v55
    %v58 = vmul.f32 %v42, %v56
    %v59 = vld [vmem:[%s1] sm:$0x1]
    %v61 = vlaneseq
    %v62 = vshrl.u32 %v61, 7
    %v63 = vsub.s32 0, %v62
    %v64 = vrot.slane %v59, %v63
    %v66 = vmul.f32 %v57, %v64
    %v67 = vmul.f32 %v58, %v64
    %v68 = vld [vmem:[%s2] sm:$0x1]
    %v70 = vlaneseq
    %v71 = vshrl.u32 %v70, 7
    %v72 = vsub.s32 0, %v71
    %v73 = vrot.slane %v68, %v72
    %v75 = vadd.f32 %v66, %v73
    %v76 = vadd.f32 %v67, %v73
    %77 = vst.msk [vmem:[#allocation5] sm:$0xff] %vm31, %v75
    %78 = vst.msk [vmem:[#allocation5 + $0x8] sm:$0x7f] %vm35, %v76
    // Predicated region
    $region18: #{relative_positional_embeddings_fwd.1} parent=1 // pred_check
      _
    $region19: #{relative_positional_embeddings_fwd.1} parent=1 // pred_check_branch
      %80 = sbr.rel (0) target = $region21
    $region20: #{relative_positional_embeddings_fwd.1} parent=1 // pred_region
      %s82 = ssub.s32 256, 256
      %83 = vsyncadd [#allocation4], %s82
      %s84 = sshll.u32 [#allocation5], 4
      %s85 = int_to_ptr.vmem [resolvable:$true] %s84
      %90 = dma.vmem_to_hbm [thread:$0]  %s85, 256, %s3, [#allocation4], 128, 128, 8
    $region21: #{relative_positional_embeddings_fwd.1} parent=1 // pred_fallthru
      _
    // Predicated region
    $region22: #{relative_positional_embeddings_fwd.1} parent=1 // pred_check
      _
    $region23: #{relative_positional_embeddings_fwd.1} parent=1 // pred_check_branch
      %92 = sbr.rel (0) target = $region25
    $region24: #{relative_positional_embeddings_fwd.1} parent=1 // pred_region
      %93 = dma.done [#allocation4], 256
    $region25: #{relative_positional_embeddings_fwd.1} parent=1 // pred_fallthru
      _
    %94 = vsyncpa [#allocation3], 1
    %95 = vsyncpa [#allocation4], 1

</llo_original>
